<compile_context>
chip_gen: v7x
topology: tpu7x:2x2x1
jax: 0.10.0
libtpu: 0.0.40
codegen_flags: <defaults>
</compile_context>

<pallas_src>
import functools
import math

import jax
import jax.numpy as jnp
from jax.experimental import pallas as pl
from jax.experimental.pallas import tpu as pltpu


def _ohem_kernel(x_ref, t_ref, out_ref, *, n_drop):
    x = x_ref[...].astype(jnp.float32)
    t = t_ref[...].astype(jnp.float32)
    d = x - t
    ad = jnp.abs(d)
    loss = jnp.where(ad < 1.0, 0.5 * d * d, ad - 0.5)          # (N, TILE)

    # Per-column sum of the kept (top-k) values:
    #   column total  -  sum of the n_drop smallest in that column.
    col_total = jnp.sum(loss, axis=0, keepdims=True)            # (1, TILE)

    if n_drop > 0:
        n = loss.shape[0]
        row_idx = jax.lax.broadcasted_iota(jnp.int32, loss.shape, 0)
        work = loss
        dropped = jnp.zeros_like(col_total)
        for _ in range(n_drop):                                 # n_drop is static
            col_min = jnp.min(work, axis=0, keepdims=True)      # sublane reduce
            dropped = dropped + col_min
            is_min = work == col_min
            # knock out exactly one occurrence per column (smallest row index)
            # so ties / duplicates are counted with the right multiplicity.
            min_row = jnp.min(jnp.where(is_min, row_idx, n), axis=0, keepdims=True)
            work = jnp.where(is_min & (row_idx == min_row),
                             jnp.float32(jnp.inf), work)
        col_total = col_total - dropped

    out_ref[...] = col_total                                    # lane-dense store


def _round_up(a, b):
    return (a + b - 1) // b * b


def smooth_l1_loss_ohem(x, target, top_k=0.75, max_tile=512):
    assert x.shape == target.shape
    n = x.shape[0]
    m = math.prod(x.shape[1:])

    if top_k == 1:
        k = n
    else:
        k = int(top_k * n)
    k = max(k, 1)               # guard: avoid k == 0 (NaN / degenerate top-k)
    n_drop = n - k
    denom = k * m               # number of elements torch.topk(...).mean() averages

    x2 = x.reshape(n, m)
    t2 = target.reshape(n, m)

    # Lane tile: big enough to approach HBM roofline, capped to avoid vreg spill.
    tile = min(max_tile, _round_up(m, 128))
    m_pad = _round_up(m, tile)
    if m_pad != m:
        # Pad with equal values -> loss == 0 in pad columns -> contributes 0.
        pad = m_pad - m
        x2 = jnp.pad(x2, ((0, 0), (0, pad)))
        t2 = jnp.pad(t2, ((0, 0), (0, pad)))

    kernel = functools.partial(_ohem_kernel, n_drop=n_drop)

    col_sums = pl.pallas_call(
        kernel,
        out_shape=jax.ShapeDtypeStruct((1, m_pad), jnp.float32),
        grid_spec=pltpu.PrefetchScalarGridSpec(
            num_scalar_prefetch=0,
            grid=(m_pad // tile,),
            in_specs=[
                pl.BlockSpec((n, tile), lambda i: (0, i)),
                pl.BlockSpec((n, tile), lambda i: (0, i)),
            ],
            out_specs=pl.BlockSpec((1, tile), lambda i: (0, i)),
        ),
        compiler_params=pltpu.CompilerParams(
            dimension_semantics=("parallel",),
        ),
    )(x2, t2)

    # Single cross-lane reduction + divide, done once in the wrapper.
    return jnp.sum(col_sums) / jnp.float32(denom)


def _reference(x, target, top_k=0.75):
    d = x - target
    ad = jnp.abs(d)
    loss = jnp.where(ad < 1.0, 0.5 * d * d, ad - 0.5)
    if top_k == 1:
        return jnp.mean(loss)
    k = max(1, int(top_k * loss.shape[0]))
    l2 = loss.reshape(loss.shape[0], -1)            # (N, M)
    top_vals = jax.lax.top_k(l2.T, k)[0]            # (M, k)
    return jnp.mean(top_vals)


if __name__ == "__main__":
    key = jax.random.PRNGKey(0)
    kx, kt = jax.random.split(key)

    # NCHW inputs: batch=8, channels=4, spatial=16x16 (M = 1024)
    x = jax.random.normal(kx, (8, 4, 16, 16), dtype=jnp.float32) * 2.0
    t = jax.random.normal(kt, (8, 4, 16, 16), dtype=jnp.float32) * 2.0

    out = smooth_l1_loss_ohem(x, t, top_k=0.75)
    out = jax.block_until_ready(out)
    ref = _reference(x, t, top_k=0.75)
    assert jnp.allclose(out, ref, rtol=1e-5, atol=1e-5), (out, ref)

    # top_k == 1 path (plain mean)
    out1 = jax.block_until_ready(smooth_l1_loss_ohem(x, t, top_k=1))
    ref1 = _reference(x, t, top_k=1)
    assert jnp.allclose(out1, ref1, rtol=1e-5, atol=1e-5), (out1, ref1)

    # Non-128-multiple spatial dim exercises the zero-contribution padding path.
    kx2, kt2 = jax.random.split(jax.random.PRNGKey(1))
    x2 = jax.random.normal(kx2, (8, 3, 10, 10), dtype=jnp.float32) * 2.0
    t2 = jax.random.normal(kt2, (8, 3, 10, 10), dtype=jnp.float32) * 2.0
    out2 = jax.block_until_ready(smooth_l1_loss_ohem(x2, t2, top_k=0.75))
    ref2 = _reference(x2, t2, top_k=0.75)
    assert jnp.allclose(out2, ref2, rtol=1e-5, atol=1e-5), (out2, ref2)

    print("KERNEL_OK")
</pallas_src>

<mosaic_0001>
module attributes {stable_mosaic.version = 11 : i64} {
  func.func @_ohem_kernel(%arg0: i32, %arg1: memref<8x512xf32, #tpu.memory_space<vmem>>, %arg2: memref<8x512xf32, #tpu.memory_space<vmem>>, %arg3: memref<1x512xf32, #tpu.memory_space<vmem>>) attributes {dimension_semantics = [#tpu.dimension_semantics<parallel>], iteration_bounds = array<i64: 2>, scalar_prefetch = 0 : i64, scratch_operands = 0 : i64, tpu.core_type = #tpu.core_type<tc>, window_params = [{transform_indices = @transform_0, window_bounds = array<i64: 8, 512>}, {transform_indices = @transform_1, window_bounds = array<i64: 8, 512>}, {transform_indices = @transform_2, window_bounds = array<i64: 1, 512>}]} {
    %c0 = arith.constant 0 : index
    %c0_0 = arith.constant 0 : index
    %0 = vector.load %arg1[%c0, %c0_0] : memref<8x512xf32, #tpu.memory_space<vmem>>, vector<8x512xf32>
    %c0_1 = arith.constant 0 : index
    %c0_2 = arith.constant 0 : index
    %1 = vector.load %arg2[%c0_1, %c0_2] : memref<8x512xf32, #tpu.memory_space<vmem>>, vector<8x512xf32>
    %2 = arith.subf %0, %1 : vector<8x512xf32>
    %3 = math.absf %2 : vector<8x512xf32>
    %cst = arith.constant 1.000000e+00 : f32
    %4 = vector.broadcast %cst : f32 to vector<8x512xf32>
    %5 = arith.cmpf olt, %3, %4 : vector<8x512xf32>
    %cst_3 = arith.constant 5.000000e-01 : f32
    %6 = vector.broadcast %cst_3 : f32 to vector<8x512xf32>
    %7 = arith.mulf %6, %2 : vector<8x512xf32>
    %8 = arith.mulf %7, %2 : vector<8x512xf32>
    %cst_4 = arith.constant 5.000000e-01 : f32
    %9 = vector.broadcast %cst_4 : f32 to vector<8x512xf32>
    %10 = arith.subf %3, %9 : vector<8x512xf32>
    %11 = arith.select %5, %8, %10 : vector<8x512xi1>, vector<8x512xf32>
    %cst_5 = arith.constant dense<0.000000e+00> : vector<512xf32>
    %12 = vector.multi_reduction <add>, %11, %cst_5 [0] : vector<8x512xf32> to vector<512xf32>
    %13 = vector.shape_cast %12 : vector<512xf32> to vector<1x512xf32>
    %14 = tpu.iota {dimensions = array<i32: 0>} : vector<8x512xi32>
    %cst_6 = arith.constant 0.000000e+00 : f32
    %15 = vector.broadcast %cst_6 : f32 to vector<1x512xf32>
    %cst_7 = arith.constant dense<0x7F800000> : vector<512xf32>
    %16 = vector.multi_reduction <minimumf>, %11, %cst_7 [0] : vector<8x512xf32> to vector<512xf32>
    %17 = vector.shape_cast %16 : vector<512xf32> to vector<1x512xf32>
    %18 = arith.addf %15, %17 : vector<1x512xf32>
    %19 = vector.broadcast %17 : vector<1x512xf32> to vector<8x512xf32>
    %20 = arith.cmpf oeq, %11, %19 : vector<8x512xf32>
    %c8_i32 = arith.constant 8 : i32
    %21 = vector.broadcast %c8_i32 : i32 to vector<8x512xi32>
    %22 = arith.select %20, %14, %21 : vector<8x512xi1>, vector<8x512xi32>
    %cst_8 = arith.constant dense<2147483647> : vector<512xi32>
    %23 = vector.multi_reduction <minsi>, %22, %cst_8 [0] : vector<8x512xi32> to vector<512xi32>
    %24 = vector.shape_cast %23 : vector<512xi32> to vector<1x512xi32>
    %25 = vector.broadcast %24 : vector<1x512xi32> to vector<8x512xi32>
    %26 = arith.cmpi eq, %14, %25 : vector<8x512xi32>
    %27 = arith.andi %20, %26 : vector<8x512xi1>
    %cst_9 = arith.constant 0x7F800000 : f32
    %28 = vector.broadcast %cst_9 : f32 to vector<8x512xf32>
    %29 = arith.select %27, %28, %11 : vector<8x512xi1>, vector<8x512xf32>
    %cst_10 = arith.constant dense<0x7F800000> : vector<512xf32>
    %30 = vector.multi_reduction <minimumf>, %29, %cst_10 [0] : vector<8x512xf32> to vector<512xf32>
    %31 = vector.shape_cast %30 : vector<512xf32> to vector<1x512xf32>
    %32 = arith.addf %18, %31 : vector<1x512xf32>
    %33 = arith.subf %13, %32 : vector<1x512xf32>
    %c0_11 = arith.constant 0 : index
    %c0_12 = arith.constant 0 : index
    %34 = vector.load %arg3[%c0_11, %c0_12] : memref<1x512xf32, #tpu.memory_space<vmem>>, vector<1x512xf32>
    tpu.vector_store %arg3[%c0_11, %c0_12], %33 {strides = array<i32>} : memref<1x512xf32, #tpu.memory_space<vmem>>, vector<1x512xf32>,
    return
  }
  func.func @transform_0(%arg0: i32) -> (i32, i32) {
    %c0_i32 = arith.constant 0 : i32
    %c0_i32_0 = arith.constant 0 : i32
    return %c0_i32, %arg0 : i32, i32
  }
  func.func @transform_1(%arg0: i32) -> (i32, i32) {
    %c0_i32 = arith.constant 0 : i32
    %c0_i32_0 = arith.constant 0 : i32
    return %c0_i32, %arg0 : i32, i32
  }
  func.func @transform_2(%arg0: i32) -> (i32, i32) {
    %c0_i32 = arith.constant 0 : i32
    %c0_i32_0 = arith.constant 0 : i32
    return %c0_i32, %arg0 : i32, i32
  }
}

</mosaic_0001>

<llo_original>
// kernel: tpu_custom_call.1
$region0: #{tpu_custom_call.1}
  #allocation0 [shape = 'u32[]', space=smem, size = 0x4, offset = 0x4, fixed_abs, tag = 'smem constant byte address 0x4 - core index']
  #allocation1 [shape = 'u32[144,128]{1,0:T(1,128)}', space=vmem, size = 0x12000, scoped, tag = 'internal scratch']
  %s0 = inlined_call_operand.hbm [shape: f32[8,1024], index: 0, kind: input, shape index: {}]
  %s1 = inlined_call_operand.hbm [shape: f32[8,1024], index: 1, kind: input, shape index: {}]
  %s2 = inlined_call_operand.hbm [shape: f32[1,1024], index: 2, kind: output, shape index: {}]
  %s3 = sld [smem:[#allocation0]]
  $region49: #{tpu_custom_call.1} parent=0
    _
  %s5 = ssub.s32 1, %s3
  %s6 = scalar_select 0, %s5, %s3
  $region1: #{tpu_custom_call.1} parent=0
    #allocation2 [shape = 'u8[32768]{0}', space=vmem, size = 0x8000, scoped, tag = 'input window, operand 0']
    #allocation3 [shape = 's32[2]{0}', space=sflag, size = 0x8, scoped, tag = 'scoped memory for tpu_custom_call.1']
    #allocation4 [shape = 's32[2]{0}', space=sflag, size = 0x8, scoped, tag = 'scoped memory for tpu_custom_call.1']
    #allocation5 [shape = 'u8[32768]{0}', space=vmem, size = 0x8000, scoped, tag = 'input window, operand 1']
    #allocation6 [shape = 's32[2]{0}', space=sflag, size = 0x8, scoped, tag = 'scoped memory for tpu_custom_call.1']
    #allocation7 [shape = 'u8[4096]{0}', space=vmem, size = 0x1000, scoped, tag = 'output window, operand 0']
    %7 = vsyncpa [#allocation3], 0
    %s8 = scalar_lea.sflag [#allocation3], 1
    %9 = vsyncpa %s8, 0
    %10 = vsyncpa [#allocation6], 0
    %s11 = scalar_lea.sflag [#allocation6], 1
    %12 = vsyncpa %s11, 0
    %13 = vsyncpa [#allocation4], 0
    %s14 = scalar_lea.sflag [#allocation4], 1
    %15 = vsyncpa %s14, 0
    loop: start=0, step=1, limit=4
    $region2: #{tpu_custom_call.1} parent=1 // loop_pre_header
      _
    $region3: #{tpu_custom_call.1} parent=1 // loop_header
      %s17 = sphi 0, %s21
      %p18 = scmp.ge.s32.totalorder %s17, 4
      %s27 = sphi 0, %s29
      %s30 = sphi 0, %s27
      %s31 = sphi 0, %s30
      %s47 = sphi 0, %s31
      %s53 = sphi 0, %s55
      %s56 = sphi 0, %s53
      %s57 = sphi 0, %s56
      %s73 = sphi 0, %s57
      %s79 = sphi 0, %s81
      %s82 = sphi 0, %s79
      %s83 = sphi 0, %s82
      %s99 = sphi 0, %s83
    $region4: #{tpu_custom_call.1} parent=1 // loop_header_branch
      %20 = sbr.rel (%p18) target = $region8
    $region5: #{tpu_custom_call.1} parent=1 // loop_body
      %s22 = ssub.s32 %s17, 1
      %s23 = ssub.s32 %s17, 2
      %s24 = sadd.s32 %s17, 1
      %s25 = ssub.s32 %s17, %s24
      %p26 = scmp.eq.s32.totalorder %s25, 0
      %s28 = sadd.s32 %s27, 1
      %s29 = scalar_select %p26, %s27, %s28
      %p32 = pneg %p26
      %p33 = scmp.eq.s32.totalorder %s17, 1
      %p34 = por %p32, %p33
      %p35 = scmp.ne.s32.totalorder %s27, %s30
      %p36 = scmp.eq.s32.totalorder %s17, 0
      %p37 = por %p35, %p36
      %p38 = scmp.ne.s32.totalorder %s27, %s30
      %p39 = scmp.eq.s32.totalorder %s22, 1
      %p40 = por %p38, %p39
      %p41 = scmp.ne.s32.totalorder %s30, %s31
      %p42 = scmp.eq.s32.totalorder %s22, 0
      %p43 = por %p41, %p42
      %p44 = scmp.ne.s32.totalorder %s30, %s31
      %p45 = scmp.eq.s32.totalorder %s23, 1
      %p46 = por %p44, %p45
      %p48 = scmp.ne.s32.totalorder %s31, %s47
      %p49 = scmp.eq.s32.totalorder %s23, 0
      %p50 = por %p48, %p49
      %s51 = ssub.s32 %s17, %s24
      %p52 = scmp.eq.s32.totalorder %s51, 0
      %s54 = sadd.s32 %s53, 1
      %s55 = scalar_select %p52, %s53, %s54
      %p58 = pneg %p52
      %p59 = scmp.eq.s32.totalorder %s17, 1
      %p60 = por %p58, %p59
      %p61 = scmp.ne.s32.totalorder %s53, %s56
      %p62 = scmp.eq.s32.totalorder %s17, 0
      %p63 = por %p61, %p62
      %p64 = scmp.ne.s32.totalorder %s53, %s56
      %p65 = scmp.eq.s32.totalorder %s22, 1
      %p66 = por %p64, %p65
      %p67 = scmp.ne.s32.totalorder %s56, %s57
      %p68 = scmp.eq.s32.totalorder %s22, 0
      %p69 = por %p67, %p68
      %p70 = scmp.ne.s32.totalorder %s56, %s57
      %p71 = scmp.eq.s32.totalorder %s23, 1
      %p72 = por %p70, %p71
      %p74 = scmp.ne.s32.totalorder %s57, %s73
      %p75 = scmp.eq.s32.totalorder %s23, 0
      %p76 = por %p74, %p75
      %s77 = ssub.s32 %s17, %s24
      %p78 = scmp.eq.s32.totalorder %s77, 0
      %s80 = sadd.s32 %s79, 1
      %s81 = scalar_select %p78, %s79, %s80
      %p84 = pneg %p78
      %p85 = scmp.eq.s32.totalorder %s17, 1
      %p86 = por %p84, %p85
      %p87 = scmp.ne.s32.totalorder %s79, %s82
      %p88 = scmp.eq.s32.totalorder %s17, 0
      %p89 = por %p87, %p88
      %p90 = scmp.ne.s32.totalorder %s79, %s82
      %p91 = scmp.eq.s32.totalorder %s22, 1
      %p92 = por %p90, %p91
      %p93 = scmp.ne.s32.totalorder %s82, %s83
      %p94 = scmp.eq.s32.totalorder %s22, 0
      %p95 = por %p93, %p94
      %p96 = scmp.ne.s32.totalorder %s82, %s83
      %p97 = scmp.eq.s32.totalorder %s23, 1
      %p98 = por %p96, %p97
      %p100 = scmp.ne.s32.totalorder %s83, %s99
      %p101 = scmp.eq.s32.totalorder %s23, 0
      %p102 = por %p100, %p101
      %p103 = scmp.le.s32.totalorder 1, %s17
      %p104 = scmp.lt.s32.totalorder %s17, 3
      %p105 = pnand %p103, %p104
      %p106 = pneg %p105
      // Predicated region
      $region9: #{tpu_custom_call.1} parent=5 // pred_check
        _
      $region10: #{tpu_custom_call.1} parent=5 // pred_check_branch
        %108 = sbr.rel (%p105) target = $region12
      $region11: #{tpu_custom_call.1} parent=5 // pred_region
        %s109 = ssub.s32 %s17, 1
      $region12: #{tpu_custom_call.1} parent=5 // pred_fallthru
        _
      %p110 = scmp.lt.s32.totalorder %s17, 2
      // Predicated region
      $region13: #{tpu_custom_call.1} parent=5 // pred_check
        %p111 = pneg %p110
      $region14: #{tpu_custom_call.1} parent=5 // pred_check_branch
        %113 = sbr.rel (%p111) target = $region16
      $region15: #{tpu_custom_call.1} parent=5 // pred_region
        // Predicated region
        $region17: #{tpu_custom_call.1} parent=15 // pred_check
          %p114 = pneg %p37
        $region18: #{tpu_custom_call.1} parent=15 // pred_check_branch
          %116 = sbr.rel (%p114) target = $region20
        $region19: #{tpu_custom_call.1} parent=15 // pred_region
          %s117 = sand.u32 %s27, 1
          %s118 = scalar_lea.sflag [#allocation3], %s117
          %s119 = sand.u32 %s27, 1
          %s120 = smul.addr %s119, 32
          %s121 = scalar_lea.vmem [#allocation2], %s120
          %s122 = smul.u32 4, %s17
          %s124 = ssub.s32 512, 512
          %125 = vsyncadd %s118, %s124
          %s126 = smul.addr %s122, 128
          %s127 = scalar_lea.hbm %s0, %s126
          %s129 = sshll.u32 %s121, 4
          %s130 = int_to_ptr.vmem [resolvable:$true] %s129
          %132 = dma.hbm_to_vmem [thread:$0]  %s127, 512, %s130, %s118
        $region20: #{tpu_custom_call.1} parent=15 // pred_fallthru
          _
        // Predicated region
        $region21: #{tpu_custom_call.1} parent=15 // pred_check
          %p133 = pneg %p63
        $region22: #{tpu_custom_call.1} parent=15 // pred_check_branch
          %135 = sbr.rel (%p133) target = $region24
        $region23: #{tpu_custom_call.1} parent=15 // pred_region
          %s136 = sand.u32 %s53, 1
          %s137 = scalar_lea.sflag [#allocation6], %s136
          %s138 = sand.u32 %s53, 1
          %s139 = smul.addr %s138, 32
          %s140 = scalar_lea.vmem [#allocation5], %s139
          %s141 = smul.u32 4, %s17
          %s143 = ssub.s32 512, 512
          %144 = vsyncadd %s137, %s143
          %s145 = smul.addr %s141, 128
          %s146 = scalar_lea.hbm %s1, %s145
          %s148 = sshll.u32 %s140, 4
          %s149 = int_to_ptr.vmem [resolvable:$true] %s148
          %151 = dma.hbm_to_vmem [thread:$0]  %s146, 512, %s149, %s137
        $region24: #{tpu_custom_call.1} parent=15 // pred_fallthru
          _
      $region16: #{tpu_custom_call.1} parent=5 // pred_fallthru
        _
      %p152 = scmp.le.s32.totalorder 1, %s17
      %p153 = scmp.lt.s32.totalorder %s17, 3
      %p154 = pnand %p152, %p153
      %p155 = pneg %p154
      // Predicated region
      $region25: #{tpu_custom_call.1} parent=5 // pred_check
        _
      $region26: #{tpu_custom_call.1} parent=5 // pred_check_branch
        %157 = sbr.rel (%p154) target = $region28
      $region27: #{tpu_custom_call.1} parent=5 // pred_region
        %s158 = ssub.s32 %s17, 1
        %s159 = sand.u32 %s30, 1
        %s160 = scalar_lea.sflag [#allocation3], %s159
        %s161 = sand.u32 %s30, 1
        %s162 = smul.addr %s161, 32
        %s163 = scalar_lea.vmem [#allocation2], %s162
        // Predicated region
        $region29: #{tpu_custom_call.1} parent=27 // pred_check
          %p164 = pneg %p43
        $region30: #{tpu_custom_call.1} parent=27 // pred_check_branch
          %166 = sbr.rel (%p164) target = $region32
        $region31: #{tpu_custom_call.1} parent=27 // pred_region
          %167 = dma.done %s160, 512
        $region32: #{tpu_custom_call.1} parent=27 // pred_fallthru
          _
        %s168 = sand.u32 %s56, 1
        %s169 = scalar_lea.sflag [#allocation6], %s168
        %s170 = sand.u32 %s56, 1
        %s171 = smul.addr %s170, 32
        %s172 = scalar_lea.vmem [#allocation5], %s171
        // Predicated region
        $region33: #{tpu_custom_call.1} parent=27 // pred_check
          %p173 = pneg %p69
        $region34: #{tpu_custom_call.1} parent=27 // pred_check_branch
          %175 = sbr.rel (%p173) target = $region36
        $region35: #{tpu_custom_call.1} parent=27 // pred_region
          %176 = dma.done %s169, 512
        $region36: #{tpu_custom_call.1} parent=27 // pred_fallthru
          _
        %s177 = sand.u32 %s30, 1
        %s178 = scalar_lea.sflag [#allocation3], %s177
        %s179 = sand.u32 %s30, 1
        %s180 = smul.addr %s179, 32
        %s181 = scalar_lea.vmem [#allocation2], %s180
        %p182 = pneg %p43
        %p183 = pneg %p40
        %s184 = sand.u32 %s56, 1
        %s185 = scalar_lea.sflag [#allocation6], %s184
        %s186 = sand.u32 %s56, 1
        %s187 = smul.addr %s186, 32
        %s188 = scalar_lea.vmem [#allocation5], %s187
        %p189 = pneg %p69
        %p190 = pneg %p66
        %p191 = pneg %p95
        %p192 = pneg %p92
        %s193 = sand.u32 %s82, 1
        %s194 = scalar_lea.sflag [#allocation4], %s193
        %s195 = sand.u32 %s82, 1
        %s196 = smul.addr %s195, 4
        %s197 = scalar_lea.vmem [#allocation7], %s196
        %s198 = smul.u32 4, %s22
        %s199 = smul.u32 4, %s22
        %s200 = smul.u32 4, %s22
        %v201 = vld [vmem:[%s163] sm:$0xff]
        %v202 = vld [vmem:[%s163 + $0x8] sm:$0xff]
        %v203 = vld [vmem:[%s163 + $0x10] sm:$0xff]
        %v204 = vld [vmem:[%s163 + $0x18] sm:$0xff]
        %v205 = vld [vmem:[%s172] sm:$0xff]
        %v206 = vld [vmem:[%s172 + $0x8] sm:$0xff]
        %v207 = vld [vmem:[%s172 + $0x10] sm:$0xff]
        %v208 = vld [vmem:[%s172 + $0x18] sm:$0xff]
        %v209 = vsub.f32 %v201, %v205
        %v210 = vsub.f32 %v202, %v206
        %v211 = vsub.f32 %v203, %v207
        %v212 = vsub.f32 %v204, %v208
        %v213 = vand.u32 2147483647, %v209
        %v214 = vand.u32 2147483647, %v210
        %v215 = vand.u32 2147483647, %v211
        %v216 = vand.u32 2147483647, %v212
        %vm217 = vcmp.lt.f32.partialorder %v213, 1.0
        %vm218 = vcmp.lt.f32.partialorder %v214, 1.0
        %vm219 = vcmp.lt.f32.partialorder %v215, 1.0
        %vm220 = vcmp.lt.f32.partialorder %v216, 1.0
        %v221 = vmul.f32 %v209, 0.5
        %v222 = vmul.f32 %v210, 0.5
        %v223 = vmul.f32 %v211, 0.5
        %v224 = vmul.f32 %v212, 0.5
        %v225 = vmul.f32 %v221, %v209
        %v226 = vmul.f32 %v222, %v210
        %v227 = vmul.f32 %v223, %v211
        %v228 = vmul.f32 %v224, %v212
        %v229 = vsub.f32 %v213, 0.5
        %v230 = vsub.f32 %v214, 0.5
        %v231 = vsub.f32 %v215, 0.5
        %v232 = vsub.f32 %v216, 0.5
        %v233 = vsel %vm217, %v225, %v229
        %v234 = vsel %vm218, %v226, %v230
        %v235 = vsel %vm219, %v227, %v231
        %v236 = vsel %vm220, %v228, %v232
        %v237 = vrot.slane %v233, 4
        %v238 = vadd.f32 %v233, %v237
        %v239 = vrot.slane %v238, 2
        %v240 = vadd.f32 %v238, %v239
        %v241 = vrot.slane %v240, 1
        %v242 = vadd.f32 %v240, %v241
        %v243 = vrot.slane %v234, 4
        %v244 = vadd.f32 %v234, %v243
        %v245 = vrot.slane %v244, 2
        %v246 = vadd.f32 %v244, %v245
        %v247 = vrot.slane %v246, 1
        %v248 = vadd.f32 %v246, %v247
        %v249 = vrot.slane %v235, 4
        %v250 = vadd.f32 %v235, %v249
        %v251 = vrot.slane %v250, 2
        %v252 = vadd.f32 %v250, %v251
        %v253 = vrot.slane %v252, 1
        %v254 = vadd.f32 %v252, %v253
        %v255 = vrot.slane %v236, 4
        %v256 = vadd.f32 %v236, %v255
        %v257 = vrot.slane %v256, 2
        %v258 = vadd.f32 %v256, %v257
        %v259 = vrot.slane %v258, 1
        %v260 = vadd.f32 %v258, %v259
        %v261 = vlaneseq
        %v262 = vshrl.u32 %v261, 7
        %v263 = vrot.slane %v233, 4
        %v264 = vmin.f32 %v233, %v263
        %v265 = vrot.slane %v264, 2
        %v266 = vmin.f32 %v264, %v265
        %v267 = vrot.slane %v266, 1
        %v268 = vmin.f32 %v266, %v267
        %v269 = vrot.slane %v234, 4
        %v270 = vmin.f32 %v234, %v269
        %v271 = vrot.slane %v270, 2
        %v272 = vmin.f32 %v270, %v271
        %v273 = vrot.slane %v272, 1
        %v274 = vmin.f32 %v272, %v273
        %v275 = vrot.slane %v235, 4
        %v276 = vmin.f32 %v235, %v275
        %v277 = vrot.slane %v276, 2
        %v278 = vmin.f32 %v276, %v277
        %v279 = vrot.slane %v278, 1
        %v280 = vmin.f32 %v278, %v279
        %v281 = vrot.slane %v236, 4
        %v282 = vmin.f32 %v236, %v281
        %v283 = vrot.slane %v282, 2
        %v284 = vmin.f32 %v282, %v283
        %v285 = vrot.slane %v284, 1
        %v286 = vmin.f32 %v284, %v285
        %v287 = vadd.f32 %v268, 0.0
        %v288 = vadd.f32 %v274, 0.0
        %v289 = vadd.f32 %v280, 0.0
        %v290 = vadd.f32 %v286, 0.0
        %vm291 = vcmp.eq.f32.partialorder %v233, %v268
        %vm292 = vcmp.eq.f32.partialorder %v234, %v274
        %vm293 = vcmp.eq.f32.partialorder %v235, %v280
        %vm294 = vcmp.eq.f32.partialorder %v236, %v286
        %v295 = vsel %vm291, %v262, 8
        %v296 = vsel %vm292, %v262, 8
        %v297 = vsel %vm293, %v262, 8
        %v298 = vsel %vm294, %v262, 8
        %v299 = vrot.slane %v295, 4
        %vm300 = vcmp.lt.s32.totalorder %v295, %v299
        %v301 = vsel %vm300, %v295, %v299
        %v302 = vrot.slane %v301, 2
        %vm303 = vcmp.lt.s32.totalorder %v301, %v302
        %v304 = vsel %vm303, %v301, %v302
        %v305 = vrot.slane %v304, 1
        %vm306 = vcmp.lt.s32.totalorder %v304, %v305
        %v307 = vsel %vm306, %v304, %v305
        %v308 = vrot.slane %v296, 4
        %vm309 = vcmp.lt.s32.totalorder %v296, %v308
        %v310 = vsel %vm309, %v296, %v308
        %v311 = vrot.slane %v310, 2
        %vm312 = vcmp.lt.s32.totalorder %v310, %v311
        %v313 = vsel %vm312, %v310, %v311
        %v314 = vrot.slane %v313, 1
        %vm315 = vcmp.lt.s32.totalorder %v313, %v314
        %v316 = vsel %vm315, %v313, %v314
        %v317 = vrot.slane %v297, 4
        %vm318 = vcmp.lt.s32.totalorder %v297, %v317
        %v319 = vsel %vm318, %v297, %v317
        %v320 = vrot.slane %v319, 2
        %vm321 = vcmp.lt.s32.totalorder %v319, %v320
        %v322 = vsel %vm321, %v319, %v320
        %v323 = vrot.slane %v322, 1
        %vm324 = vcmp.lt.s32.totalorder %v322, %v323
        %v325 = vsel %vm324, %v322, %v323
        %v326 = vrot.slane %v298, 4
        %vm327 = vcmp.lt.s32.totalorder %v298, %v326
        %v328 = vsel %vm327, %v298, %v326
        %v329 = vrot.slane %v328, 2
        %vm330 = vcmp.lt.s32.totalorder %v328, %v329
        %v331 = vsel %vm330, %v328, %v329
        %v332 = vrot.slane %v331, 1
        %vm333 = vcmp.lt.s32.totalorder %v331, %v332
        %v334 = vsel %vm333, %v331, %v332
        %vm335 = vcmp.eq.s32.totalorder %v262, %v307
        %vm336 = vcmp.eq.s32.totalorder %v262, %v316
        %vm337 = vcmp.eq.s32.totalorder %v262, %v325
        %vm338 = vcmp.eq.s32.totalorder %v262, %v334
        %vm339 = vmand %vm291, %vm335
        %vm340 = vmand %vm292, %vm336
        %vm341 = vmand %vm293, %vm337
        %vm342 = vmand %vm294, %vm338
        %v343 = vsel %vm339, inf, %v233
        %v344 = vsel %vm340, inf, %v234
        %v345 = vsel %vm341, inf, %v235
        %v346 = vsel %vm342, inf, %v236
        %v347 = vrot.slane %v343, 4
        %v348 = vmin.f32 %v343, %v347
        %v349 = vrot.slane %v348, 2
        %v350 = vmin.f32 %v348, %v349
        %v351 = vrot.slane %v350, 1
        %v352 = vmin.f32 %v350, %v351
        %v353 = vrot.slane %v344, 4
        %v354 = vmin.f32 %v344, %v353
        %v355 = vrot.slane %v354, 2
        %v356 = vmin.f32 %v354, %v355
        %v357 = vrot.slane %v356, 1
        %v358 = vmin.f32 %v356, %v357
        %v359 = vrot.slane %v345, 4
        %v360 = vmin.f32 %v345, %v359
        %v361 = vrot.slane %v360, 2
        %v362 = vmin.f32 %v360, %v361
        %v363 = vrot.slane %v362, 1
        %v364 = vmin.f32 %v362, %v363
        %v365 = vrot.slane %v346, 4
        %v366 = vmin.f32 %v346, %v365
        %v367 = vrot.slane %v366, 2
        %v368 = vmin.f32 %v366, %v367
        %v369 = vrot.slane %v368, 1
        %v370 = vmin.f32 %v368, %v369
        %v371 = vadd.f32 %v287, %v352
        %v372 = vadd.f32 %v288, %v358
        %v373 = vadd.f32 %v289, %v364
        %v374 = vadd.f32 %v290, %v370
        %v375 = vsub.f32 %v242, %v371
        %v376 = vsub.f32 %v248, %v372
        %v377 = vsub.f32 %v254, %v373
        %v378 = vsub.f32 %v260, %v374
        %v383 = vcombine.low %v375, %v376
        %v384 = vcombine.low %v377, %v378
        %v386 = vunpack.c.l.s4 1966171168
        %v387 = vunpack.c.0.s8 %v386
        %v388 = vlaneseq
        %v389 = vshrl.u32 %v388, 7
        %v390 = vsub.s32 %v387, %v389
        %v391 = vrot.slane %v383, %v390
        %v393 = vunpack.c.l.s4 1966171168
        %v394 = vunpack.c.0.s8 %v393
        %v395 = vlaneseq
        %v396 = vshrl.u32 %v395, 7
        %v397 = vsub.s32 %v394, %v396
        %v398 = vrot.slane %v384, %v397
        %v399 = vcombine.low %v391, %v398
        %v401 = vunpack.c.l.s4 1966171168
        %v402 = vunpack.c.0.s8 %v401
        %v403 = vlaneseq
        %v404 = vshrl.u32 %v403, 7
        %v405 = vsub.s32 %v402, %v404
        %v406 = vrot.slane %v399, %v405
        %v408 = vlaneseq
        %vm409 = vcmp.ge.s32.totalorder %v408, 0
        %vm410 = vcmp.lt.s32.totalorder %v408, 512
        %vm411 = vmand %vm409, %vm410
        %412 = vst.msk [vmem:[%s197] sm:$0xf] %vm411, %v406
        %s413 = sand.u32 %s82, 1
        %s414 = scalar_lea.sflag [#allocation4], %s413
        %s415 = sand.u32 %s82, 1
        %s416 = smul.addr %s415, 4
        %s417 = scalar_lea.vmem [#allocation7], %s416
        // Predicated region
        $region37: #{tpu_custom_call.1} parent=27 // pred_check
          %p418 = pneg %p92
        $region38: #{tpu_custom_call.1} parent=27 // pred_check_branch
          %420 = sbr.rel (%p418) target = $region40
        $region39: #{tpu_custom_call.1} parent=27 // pred_region
          %s421 = smul.u32 4, %s22
          %s423 = ssub.s32 64, 64
          %424 = vsyncadd %s414, %s423
          %s425 = smul.addr %s421, 16
          %s426 = scalar_lea.hbm %s2, %s425
          %s428 = sshll.u32 %s417, 4
          %s429 = int_to_ptr.vmem [resolvable:$true] %s428
          %431 = dma.vmem_to_hbm [thread:$0]  %s429, 64, %s426, %s414
        $region40: #{tpu_custom_call.1} parent=27 // pred_fallthru
          _
      $region28: #{tpu_custom_call.1} parent=5 // pred_fallthru
        _
      %p432 = scmp.le.s32.totalorder 2, %s17
      // Predicated region
      $region41: #{tpu_custom_call.1} parent=5 // pred_check
        %p433 = pneg %p432
      $region42: #{tpu_custom_call.1} parent=5 // pred_check_branch
        %435 = sbr.rel (%p433) target = $region44
      $region43: #{tpu_custom_call.1} parent=5 // pred_region
        %s436 = ssub.s32 %s17, 2
        // Predicated region
        $region45: #{tpu_custom_call.1} parent=43 // pred_check
          %p437 = pneg %p98
        $region46: #{tpu_custom_call.1} parent=43 // pred_check_branch
          %439 = sbr.rel (%p437) target = $region48
        $region47: #{tpu_custom_call.1} parent=43 // pred_region
          %s440 = sand.u32 %s83, 1
          %s441 = scalar_lea.sflag [#allocation4], %s440
          %s442 = sand.u32 %s83, 1
          %s443 = smul.addr %s442, 4
          %s444 = scalar_lea.vmem [#allocation7], %s443
          %445 = dma.done %s441, 64
        $region48: #{tpu_custom_call.1} parent=43 // pred_fallthru
          _
      $region44: #{tpu_custom_call.1} parent=5 // pred_fallthru
        _
    $region6: #{tpu_custom_call.1} parent=1 // loop_footer
      %s21 = sadd.s32 1, %s17
    $region7: #{tpu_custom_call.1} parent=1 // loop_footer_branch
      %16 = sbr.rel target = $region3
    $region8: #{tpu_custom_call.1} parent=1 // loop_exit
      _
    %446 = vsyncpa [#allocation3], 1
    %s447 = scalar_lea.sflag [#allocation3], 1
    %448 = vsyncpa %s447, 1
    %449 = vsyncpa [#allocation6], 1
    %s450 = scalar_lea.sflag [#allocation6], 1
    %451 = vsyncpa %s450, 1
    %452 = vsyncpa [#allocation4], 1
    %s453 = scalar_lea.sflag [#allocation4], 1
    %454 = vsyncpa %s453, 1

</llo_original>
